<compile_context>
chip_gen: v5e
topology: v5e:2x2
jax: 0.10.0
libtpu: 0.0.40
codegen_flags: <defaults>
</compile_context>

<pallas_src>
import jax
import jax.numpy as jnp
from jax.experimental import pallas as pl
from jax.experimental.pallas import tpu as pltpu


LAYERS = [6, 20, 20, 6]
TILE_B_MAX = 32768  # lane-dense batch tile (multiple of 128); ~6 MiB/tile working set


def _round_up(x, m):
    return ((x + m - 1) // m) * m


def pinn_kernel(x_ref, w1_ref, b1_ref, w2_ref, b2_ref, w3_ref, b3_ref, o_ref):
    # x_ref: (6, TILE_B)  — batch on lanes, features on sublanes.
    x = x_ref[...]
    # Hidden layer 1: Linear + ReLU   -> (20, TILE_B)
    h = jnp.dot(w1_ref[...], x, preferred_element_type=jnp.float32)
    h = jnp.maximum(h + b1_ref[...], 0.0)
    # Hidden layer 2: Linear + ReLU   -> (20, TILE_B)
    h = jnp.dot(w2_ref[...], h, preferred_element_type=jnp.float32)
    h = jnp.maximum(h + b2_ref[...], 0.0)
    # Output layer: Linear (no activation) -> (6, TILE_B), full unmasked lane-dense store
    out = jnp.dot(w3_ref[...], h, preferred_element_type=jnp.float32) + b3_ref[...]
    o_ref[...] = out.astype(o_ref.dtype)


def pinn_forward(x, params, tile_b=TILE_B_MAX):
    """x: (B, in_dim) float32; params: list of (W(out,in), b(out,)) per Linear layer
    (PyTorch nn.Linear convention). Returns (B, out_dim) float32."""
    # TODO(synk): pallas_call has no automatic VJP; wrap in jax.custom_vjp if PINN
    # training needs gradients through this forward.
    B, in_dim = x.shape
    out_dim = params[-1][0].shape[0]

    # Lane-dense batch tiling: pad B up to a multiple of 128 (and of the tile).
    b_pad = _round_up(max(B, 1), 128)
    tile_b = min(tile_b, b_pad)
    b_pad = _round_up(b_pad, tile_b)
    n_tiles = b_pad // tile_b

    # Transpose so batch is the lane (last) axis; zero-pad the ragged tail
    # (padded columns are computed then dropped when slicing the output).
    xt = jnp.pad(x.T.astype(jnp.float32), ((0, 0), (0, b_pad - B)))

    flat_args = [xt]
    param_specs = []
    for w, b in params:
        o, i = w.shape
        flat_args.append(w)
        flat_args.append(b.reshape(o, 1))
        # Full-array blocks with constant index_map -> weights stay VMEM-resident.
        param_specs.append(pl.BlockSpec((o, i), lambda t: (0, 0)))
        param_specs.append(pl.BlockSpec((o, 1), lambda t: (0, 0)))

    # Advisory cost: ~1.3 KFLOP/row, HBM-bandwidth bound.
    flops = 2 * b_pad * sum(w.shape[0] * w.shape[1] for w, _ in params)
    param_bytes = sum((w.size + b.size) * 4 for w, b in params)
    bytes_accessed = b_pad * (in_dim + out_dim) * 4 + param_bytes

    out_t = pl.pallas_call(
        pinn_kernel,
        out_shape=jax.ShapeDtypeStruct((out_dim, b_pad), jnp.float32),
        grid=(n_tiles,),
        in_specs=[pl.BlockSpec((in_dim, tile_b), lambda t: (0, t))] + param_specs,
        out_specs=pl.BlockSpec((out_dim, tile_b), lambda t: (0, t)),
        compiler_params=pltpu.CompilerParams(dimension_semantics=("parallel",)),
        cost_estimate=pl.CostEstimate(
            flops=flops, transcendentals=0, bytes_accessed=bytes_accessed
        ),
    )(*flat_args)

    # Back to PyTorch-style (B, out_dim) layout, dropping the padded columns.
    return out_t[:, :B].T


def init_params(key, layers):
    """Deterministic init mirroring PyTorch nn.Linear default (uniform ±1/sqrt(fan_in)).
    Weights stored in PyTorch convention: W (out, in), b (out,)."""
    params = []
    for i in range(len(layers) - 1):
        fan_in, fan_out = layers[i], layers[i + 1]
        key, kw, kb = jax.random.split(key, 3)
        bound = 1.0 / jnp.sqrt(fan_in)
        w = jax.random.uniform(kw, (fan_out, fan_in), jnp.float32, -bound, bound)
        b = jax.random.uniform(kb, (fan_out,), jnp.float32, -bound, bound)
        params.append((w, b))
    return params


def reference_forward(x, params):
    h = x
    for i, (w, b) in enumerate(params):
        h = h @ w.T + b
        if i < len(params) - 1:
            h = jnp.maximum(h, 0.0)
    return h


if __name__ == "__main__":
    key = jax.random.PRNGKey(0)
    key, kx = jax.random.split(key)

    B = 8
    x = jax.random.normal(kx, (B, LAYERS[0]), dtype=jnp.float32)
    params = init_params(key, LAYERS)

    out = pinn_forward(x, params)
    out = jax.block_until_ready(out)

    ref = reference_forward(x, params)
    assert out.shape == (B, LAYERS[-1])
    assert jnp.allclose(out, ref, atol=1e-5, rtol=1e-5), "mismatch vs reference"

    print("KERNEL_OK")
</pallas_src>

<mosaic_0001>
module attributes {stable_mosaic.version = 11 : i64} {
  func.func @pinn_kernel(%arg0: i32, %arg1: memref<6x128xf32, #tpu.memory_space<vmem>>, %arg2: memref<20x6xf32, #tpu.memory_space<vmem>>, %arg3: memref<20x1xf32, #tpu.memory_space<vmem>>, %arg4: memref<20x20xf32, #tpu.memory_space<vmem>>, %arg5: memref<20x1xf32, #tpu.memory_space<vmem>>, %arg6: memref<6x20xf32, #tpu.memory_space<vmem>>, %arg7: memref<6x1xf32, #tpu.memory_space<vmem>>, %arg8: memref<6x128xf32, #tpu.memory_space<vmem>>) attributes {dimension_semantics = [#tpu.dimension_semantics<parallel>], iteration_bounds = array<i64: 1>, scalar_prefetch = 0 : i64, scratch_operands = 0 : i64, tpu.core_type = #tpu.core_type<tc>, window_params = [{transform_indices = @transform_0, window_bounds = array<i64: 6, 128>}, {pipeline_mode = #tpu.pipeline_mode<synchronous>, transform_indices = @transform_1, window_bounds = array<i64: 20, 6>}, {pipeline_mode = #tpu.pipeline_mode<synchronous>, transform_indices = @transform_2, window_bounds = array<i64: 20, 1>}, {pipeline_mode = #tpu.pipeline_mode<synchronous>, transform_indices = @transform_3, window_bounds = array<i64: 20, 20>}, {pipeline_mode = #tpu.pipeline_mode<synchronous>, transform_indices = @transform_4, window_bounds = array<i64: 20, 1>}, {pipeline_mode = #tpu.pipeline_mode<synchronous>, transform_indices = @transform_5, window_bounds = array<i64: 6, 20>}, {pipeline_mode = #tpu.pipeline_mode<synchronous>, transform_indices = @transform_6, window_bounds = array<i64: 6, 1>}, {transform_indices = @transform_7, window_bounds = array<i64: 6, 128>}]} {
    %c0 = arith.constant 0 : index
    %c0_0 = arith.constant 0 : index
    %0 = vector.load %arg1[%c0, %c0_0] : memref<6x128xf32, #tpu.memory_space<vmem>>, vector<6x128xf32>
    %c0_1 = arith.constant 0 : index
    %c0_2 = arith.constant 0 : index
    %1 = vector.load %arg2[%c0_1, %c0_2] : memref<20x6xf32, #tpu.memory_space<vmem>>, vector<20x6xf32>
    %cst = arith.constant dense<0.000000e+00> : vector<20x128xf32>
    %2 = tpu.matmul %1, %0, %cst {dimension_numbers = #tpu.dot_dimension_numbers<[1], [0], [0], [1], [0, 0, 1, 1], [], []>} : vector<20x6xf32>, vector<6x128xf32>, vector<20x128xf32> -> vector<20x128xf32>
    %c0_3 = arith.constant 0 : index
    %c0_4 = arith.constant 0 : index
    %3 = vector.load %arg3[%c0_3, %c0_4] : memref<20x1xf32, #tpu.memory_space<vmem>>, vector<20x1xf32>
    %4 = vector.broadcast %3 : vector<20x1xf32> to vector<20x128xf32>
    %5 = arith.addf %2, %4 : vector<20x128xf32>
    %cst_5 = arith.constant 0.000000e+00 : f32
    %6 = vector.broadcast %cst_5 : f32 to vector<20x128xf32>
    %7 = arith.maximumf %5, %6 : vector<20x128xf32>
    %c0_6 = arith.constant 0 : index
    %c0_7 = arith.constant 0 : index
    %8 = vector.load %arg4[%c0_6, %c0_7] : memref<20x20xf32, #tpu.memory_space<vmem>>, vector<20x20xf32>
    %cst_8 = arith.constant dense<0.000000e+00> : vector<20x128xf32>
    %9 = tpu.matmul %8, %7, %cst_8 {dimension_numbers = #tpu.dot_dimension_numbers<[1], [0], [0], [1], [0, 0, 1, 1], [], []>} : vector<20x20xf32>, vector<20x128xf32>, vector<20x128xf32> -> vector<20x128xf32>
    %c0_9 = arith.constant 0 : index
    %c0_10 = arith.constant 0 : index
    %10 = vector.load %arg5[%c0_9, %c0_10] : memref<20x1xf32, #tpu.memory_space<vmem>>, vector<20x1xf32>
    %11 = vector.broadcast %10 : vector<20x1xf32> to vector<20x128xf32>
    %12 = arith.addf %9, %11 : vector<20x128xf32>
    %cst_11 = arith.constant 0.000000e+00 : f32
    %13 = vector.broadcast %cst_11 : f32 to vector<20x128xf32>
    %14 = arith.maximumf %12, %13 : vector<20x128xf32>
    %c0_12 = arith.constant 0 : index
    %c0_13 = arith.constant 0 : index
    %15 = vector.load %arg6[%c0_12, %c0_13] : memref<6x20xf32, #tpu.memory_space<vmem>>, vector<6x20xf32>
    %cst_14 = arith.constant dense<0.000000e+00> : vector<6x128xf32>
    %16 = tpu.matmul %15, %14, %cst_14 {dimension_numbers = #tpu.dot_dimension_numbers<[1], [0], [0], [1], [0, 0, 1, 1], [], []>} : vector<6x20xf32>, vector<20x128xf32>, vector<6x128xf32> -> vector<6x128xf32>
    %c0_15 = arith.constant 0 : index
    %c0_16 = arith.constant 0 : index
    %17 = vector.load %arg7[%c0_15, %c0_16] : memref<6x1xf32, #tpu.memory_space<vmem>>, vector<6x1xf32>
    %18 = vector.broadcast %17 : vector<6x1xf32> to vector<6x128xf32>
    %19 = arith.addf %16, %18 : vector<6x128xf32>
    %c0_17 = arith.constant 0 : index
    %c0_18 = arith.constant 0 : index
    %20 = vector.load %arg8[%c0_17, %c0_18] : memref<6x128xf32, #tpu.memory_space<vmem>>, vector<6x128xf32>
    tpu.vector_store %arg8[%c0_17, %c0_18], %19 {strides = array<i32>} : memref<6x128xf32, #tpu.memory_space<vmem>>, vector<6x128xf32>,
    return
  }
  func.func @transform_0(%arg0: i32) -> (i32, i32) {
    %c0_i32 = arith.constant 0 : i32
    %c0_i32_0 = arith.constant 0 : i32
    return %c0_i32, %arg0 : i32, i32
  }
  func.func @transform_1(%arg0: i32) -> (i32, i32) {
    %c0_i32 = arith.constant 0 : i32
    %c0_i32_0 = arith.constant 0 : i32
    %c0_i32_1 = arith.constant 0 : i32
    return %c0_i32, %c0_i32_0 : i32, i32
  }
  func.func @transform_2(%arg0: i32) -> (i32, i32) {
    %c0_i32 = arith.constant 0 : i32
    %c0_i32_0 = arith.constant 0 : i32
    %c0_i32_1 = arith.constant 0 : i32
    return %c0_i32, %c0_i32_0 : i32, i32
  }
  func.func @transform_3(%arg0: i32) -> (i32, i32) {
    %c0_i32 = arith.constant 0 : i32
    %c0_i32_0 = arith.constant 0 : i32
    %c0_i32_1 = arith.constant 0 : i32
    return %c0_i32, %c0_i32_0 : i32, i32
  }
  func.func @transform_4(%arg0: i32) -> (i32, i32) {
    %c0_i32 = arith.constant 0 : i32
    %c0_i32_0 = arith.constant 0 : i32
    %c0_i32_1 = arith.constant 0 : i32
    return %c0_i32, %c0_i32_0 : i32, i32
  }
  func.func @transform_5(%arg0: i32) -> (i32, i32) {
    %c0_i32 = arith.constant 0 : i32
    %c0_i32_0 = arith.constant 0 : i32
    %c0_i32_1 = arith.constant 0 : i32
    return %c0_i32, %c0_i32_0 : i32, i32
  }
  func.func @transform_6(%arg0: i32) -> (i32, i32) {
    %c0_i32 = arith.constant 0 : i32
    %c0_i32_0 = arith.constant 0 : i32
    %c0_i32_1 = arith.constant 0 : i32
    return %c0_i32, %c0_i32_0 : i32, i32
  }
  func.func @transform_7(%arg0: i32) -> (i32, i32) {
    %c0_i32 = arith.constant 0 : i32
    %c0_i32_0 = arith.constant 0 : i32
    return %c0_i32, %arg0 : i32, i32
  }
}

</mosaic_0001>

<llo_original>
// kernel: tpu_custom_call.1
$region0: #{tpu_custom_call.1}
  #allocation0 [shape = 'u32[]', space=smem, size = 0x4, offset = 0x4, fixed_abs, tag = 'smem constant byte address 0x4 - core index']
  #allocation1 [shape = 'u32[72,128]{1,0:T(1,128)}', space=vmem, size = 0x9000, scoped, tag = 'internal scratch']
  %s0 = inlined_call_operand.vmem [shape: f32[6,128], index: 0, kind: input, shape index: {}]
  %s1 = inlined_call_operand.vmem [shape: f32[20,6], index: 1, kind: input, shape index: {}]
  %s2 = inlined_call_operand.vmem [shape: f32[20,1], index: 2, kind: input, shape index: {}]
  %s3 = inlined_call_operand.vmem [shape: f32[20,20], index: 3, kind: input, shape index: {}]
  %s4 = inlined_call_operand.vmem [shape: f32[20,1], index: 4, kind: input, shape index: {}]
  %s5 = inlined_call_operand.vmem [shape: f32[6,20], index: 5, kind: input, shape index: {}]
  %s6 = inlined_call_operand.vmem [shape: f32[6,1], index: 6, kind: input, shape index: {}]
  %s7 = inlined_call_operand.hbm [shape: f32[6,128], index: 7, kind: output, shape index: {}]
  %s8 = sld [smem:[#allocation0]]
  $region38: #{tpu_custom_call.1} parent=0
    _
  %s10 = ssub.s32 1, %s8
  %s11 = scalar_select 0, %s10, %s8
  $region1: #{tpu_custom_call.1} parent=0
    #allocation2 [shape = 'u8[4096]{0}', space=vmem, size = 0x1000, scoped, tag = 'output window, operand 0, single buffered']
    #allocation3 [shape = 's32[1]{0}', space=sflag, size = 0x4, scoped, tag = 'scoped memory for tpu_custom_call.1']
    %12 = vsyncpa [#allocation3], 0
    // Predicated region
    $region2: #{tpu_custom_call.1} parent=1 // pred_check
      _
    $region3: #{tpu_custom_call.1} parent=1 // pred_check_branch
      %14 = sbr.rel (0) target = $region5
    $region4: #{tpu_custom_call.1} parent=1 // pred_region
      _
    $region5: #{tpu_custom_call.1} parent=1 // pred_fallthru
      _
    // Predicated region
    $region6: #{tpu_custom_call.1} parent=1 // pred_check
      _
    $region7: #{tpu_custom_call.1} parent=1 // pred_check_branch
      %16 = sbr.rel (0) target = $region9
    $region8: #{tpu_custom_call.1} parent=1 // pred_region
      _
    $region9: #{tpu_custom_call.1} parent=1 // pred_fallthru
      _
    // Predicated region
    $region10: #{tpu_custom_call.1} parent=1 // pred_check
      _
    $region11: #{tpu_custom_call.1} parent=1 // pred_check_branch
      %18 = sbr.rel (0) target = $region13
    $region12: #{tpu_custom_call.1} parent=1 // pred_region
      _
    $region13: #{tpu_custom_call.1} parent=1 // pred_fallthru
      _
    // Predicated region
    $region14: #{tpu_custom_call.1} parent=1 // pred_check
      _
    $region15: #{tpu_custom_call.1} parent=1 // pred_check_branch
      %20 = sbr.rel (0) target = $region17
    $region16: #{tpu_custom_call.1} parent=1 // pred_region
      _
    $region17: #{tpu_custom_call.1} parent=1 // pred_fallthru
      _
    // Predicated region
    $region18: #{tpu_custom_call.1} parent=1 // pred_check
      _
    $region19: #{tpu_custom_call.1} parent=1 // pred_check_branch
      %22 = sbr.rel (0) target = $region21
    $region20: #{tpu_custom_call.1} parent=1 // pred_region
      _
    $region21: #{tpu_custom_call.1} parent=1 // pred_fallthru
      _
    // Predicated region
    $region22: #{tpu_custom_call.1} parent=1 // pred_check
      _
    $region23: #{tpu_custom_call.1} parent=1 // pred_check_branch
      %24 = sbr.rel (0) target = $region25
    $region24: #{tpu_custom_call.1} parent=1 // pred_region
      _
    $region25: #{tpu_custom_call.1} parent=1 // pred_fallthru
      _
    // Predicated region
    $region26: #{tpu_custom_call.1} parent=1 // pred_check
      _
    $region27: #{tpu_custom_call.1} parent=1 // pred_check_branch
      %26 = sbr.rel (0) target = $region29
    $region28: #{tpu_custom_call.1} parent=1 // pred_region
      _
    $region29: #{tpu_custom_call.1} parent=1 // pred_fallthru
      _
    %v27 = vld [vmem:[%s0] sm:$0x3f]
    %v28 = vld [vmem:[%s1] sm:$0xff]
    %v29 = vld [vmem:[%s1 + $0x8] sm:$0xff]
    %v30 = vld [vmem:[%s1 + $0x10] sm:$0xf]
    %v31 = vld [vmem:[%s2] sm:$0xff]
    %v32 = vld [vmem:[%s2 + $0x8] sm:$0xff]
    %v33 = vld [vmem:[%s2 + $0x10] sm:$0xf]
    %35 = vset.pattern.permute.xlu0 0
    %36 = vperm.xlu0 %35, %v31
    %v37 = vpop.permute.xlu0 %36
    %40 = vset.pattern.permute.xlu0 0
    %41 = vperm.xlu0 %40, %v32
    %v42 = vpop.permute.xlu0 %41
    %45 = vset.pattern.permute.xlu0 0
    %46 = vperm.xlu0 %45, %v33
    %v47 = vpop.permute.xlu0 %46
    %vm49 = vcmask 48128
    %v51 = vsel %vm49, %v28, 0
    %v54 = vsel %vm49, %v29, 0
    %v57 = vsel %vm49, %v30, 0
    %vm59 = vcmask 1045504
    %v61 = vsel %vm59, %v27, 0
    %63 = vmatpush.msra.mxu0 0.0
    %64 = vmatpush.msra.mxu0 0.0
    %65 = vmatpush.msra.mxu0 0.0
    %66 = vmatpush.msra.mxu0 0.0
    %67 = vmatpush.msra.mxu0 0.0
    %68 = vmatpush.msra.mxu0 0.0
    %69 = vmatpush.msra.mxu0 0.0
    %70 = vmatpush.msra.mxu0 0.0
    %71 = vmatpush.msra.mxu0 0.0
    %72 = vmatpush.msra.mxu0 0.0
    %73 = vmatpush.msra.mxu0 0.0
    %74 = vmatpush.msra.mxu0 0.0
    %75 = vmatpush.msra.mxu0 0.0
    %76 = vmatpush.msra.mxu0 0.0
    %77 = vmatpush.msra.mxu0 0.0
    %78 = vmatpush.msra.mxu0 %v61
    %79 = vmatmul.f32.gmra.mxu0 %v51
    %v80 = vpop.f32.mrf.mxu0
    %v81 = vadd.f32 %v37, %v80
    %82 = vmatmul.f32.gmra.mxu0 %v54
    %v83 = vpop.f32.mrf.mxu0
    %v84 = vadd.f32 %v42, %v83
    %85 = vmatmul.f32.gmra.mxu0 %v57
    %v86 = vpop.f32.mrf.mxu0
    %v87 = vadd.f32 %v47, %v86
    %88 = vdwg.mxu0
    %v89 = vmax.f32 %v81, 0.0
    %v90 = vmax.f32 %v84, 0.0
    %v91 = vmax.f32 %v87, 0.0
    %v92 = vld [vmem:[%s3] sm:$0xff]
    %v93 = vld [vmem:[%s3 + $0x8] sm:$0xff]
    %v94 = vld [vmem:[%s3 + $0x10] sm:$0xf]
    %v95 = vld [vmem:[%s4] sm:$0xff]
    %v96 = vld [vmem:[%s4 + $0x8] sm:$0xff]
    %v97 = vld [vmem:[%s4 + $0x10] sm:$0xf]
    %99 = vset.pattern.permute.xlu0 0
    %100 = vperm.xlu0 %99, %v95
    %v101 = vpop.permute.xlu0 %100
    %104 = vset.pattern.permute.xlu0 0
    %105 = vperm.xlu0 %104, %v96
    %v106 = vpop.permute.xlu0 %105
    %109 = vset.pattern.permute.xlu0 0
    %110 = vperm.xlu0 %109, %v97
    %v111 = vpop.permute.xlu0 %110
    %vm113 = vcmask 162816
    %v115 = vsel %vm113, %v92, 0
    %v118 = vsel %vm113, %v93, 0
    %v121 = vsel %vm113, %v94, 0
    %vm123 = vcmask 1043456
    %v125 = vsel %vm123, %v91, 0
    %127 = vmatpush.msra.mxu0 0.0
    %128 = vmatpush.msra.mxu0 0.0
    %129 = vmatpush.msra.mxu0 0.0
    %130 = vmatpush.msra.mxu0 0.0
    %131 = vmatpush.msra.mxu0 0.0
    %132 = vmatpush.msra.mxu0 0.0
    %133 = vmatpush.msra.mxu0 0.0
    %134 = vmatpush.msra.mxu0 0.0
    %135 = vmatpush.msra.mxu0 0.0
    %136 = vmatpush.msra.mxu0 0.0
    %137 = vmatpush.msra.mxu0 0.0
    %138 = vmatpush.msra.mxu0 0.0
    %139 = vmatpush.msra.mxu0 0.0
    %140 = vmatpush.msra.mxu0 %v125
    %141 = vmatpush.msra.mxu0 %v90
    %142 = vmatpush.msra.mxu0 %v89
    %143 = vmatmul.f32.gmra.mxu0 %v115
    %v144 = vpop.f32.mrf.mxu0
    %v145 = vadd.f32 %v101, %v144
    %146 = vmatmul.f32.gmra.mxu0 %v118
    %v147 = vpop.f32.mrf.mxu0
    %v148 = vadd.f32 %v106, %v147
    %149 = vmatmul.f32.gmra.mxu0 %v121
    %v150 = vpop.f32.mrf.mxu0
    %v151 = vadd.f32 %v111, %v150
    %152 = vdwg.mxu0
    %v153 = vmax.f32 %v145, 0.0
    %v154 = vmax.f32 %v148, 0.0
    %v155 = vmax.f32 %v151, 0.0
    %v156 = vld [vmem:[%s5] sm:$0x3f]
    %v157 = vld [vmem:[%s6] sm:$0x3f]
    %159 = vset.pattern.permute.xlu0 0
    %160 = vperm.xlu0 %159, %v157
    %v161 = vpop.permute.xlu0 %160
    %v164 = vsel %vm113, %v156, 0
    %v167 = vsel %vm123, %v155, 0
    %169 = vmatpush.msra.mxu0 0.0
    %170 = vmatpush.msra.mxu0 0.0
    %171 = vmatpush.msra.mxu0 0.0
    %172 = vmatpush.msra.mxu0 0.0
    %173 = vmatpush.msra.mxu0 0.0
    %174 = vmatpush.msra.mxu0 0.0
    %175 = vmatpush.msra.mxu0 0.0
    %176 = vmatpush.msra.mxu0 0.0
    %177 = vmatpush.msra.mxu0 0.0
    %178 = vmatpush.msra.mxu0 0.0
    %179 = vmatpush.msra.mxu0 0.0
    %180 = vmatpush.msra.mxu0 0.0
    %181 = vmatpush.msra.mxu0 0.0
    %182 = vmatpush.msra.mxu0 %v167
    %183 = vmatpush.msra.mxu0 %v154
    %184 = vmatpush.msra.mxu0 %v153
    %185 = vmatmul.f32.gmra.mxu0 %v164
    %v186 = vpop.f32.mrf.mxu0
    %v187 = vadd.f32 %v161, %v186
    %188 = vdwg.mxu0
    %189 = vst [vmem:[#allocation2] sm:$0x3f] %v187
    // Predicated region
    $region30: #{tpu_custom_call.1} parent=1 // pred_check
      _
    $region31: #{tpu_custom_call.1} parent=1 // pred_check_branch
      %191 = sbr.rel (0) target = $region33
    $region32: #{tpu_custom_call.1} parent=1 // pred_region
      %193 = vsyncadd [#allocation3], 0
      %s195 = sshll.u32 [#allocation2], 4
      %s196 = int_to_ptr.vmem [resolvable:$true] %s195
      %s197 = sshll.u32 %s7, 4
      %s198 = int_to_ptr.hbm [resolvable:$true] %s197
      %200 = dma.vmem_to_hbm [thread:$0]  %s196, 128, %s198, [#allocation3]
    $region33: #{tpu_custom_call.1} parent=1 // pred_fallthru
      _
    // Predicated region
    $region34: #{tpu_custom_call.1} parent=1 // pred_check
      _
    $region35: #{tpu_custom_call.1} parent=1 // pred_check_branch
      %202 = sbr.rel (0) target = $region37
    $region36: #{tpu_custom_call.1} parent=1 // pred_region
      %204 = dma.done [#allocation3], 128
    $region37: #{tpu_custom_call.1} parent=1 // pred_fallthru
      _
    %205 = vsyncpa [#allocation3], 1

</llo_original>
